<compile_context>
chip_gen: v6e
topology: v6e:2x2x1
jax: 0.10.0
libtpu: 0.0.40
codegen_flags: <defaults>
</compile_context>

<pallas_src>
import functools
import math

import jax
import jax.numpy as jnp
from jax import lax
from jax.experimental import pallas as pl
from jax.experimental.pallas import tpu as pltpu


# ---------------------------------------------------------------------------
# Pallas kernel (one grid step == one GraphConvolution layer)
# ---------------------------------------------------------------------------

def _gcn_fused_kernel(x_ref, adj_ref, w_ref, b_ref, o_ref, h_ref, *,
                      nlayers, nout):
    """Fused GCN stack.

    x_ref  : [N_PAD, F_PAD]    f32   (resident; read only at l == 0)
    adj_ref: [N_PAD, N_PAD]    bf16  (resident)
    w_ref  : [1, F_PAD, F_PAD] f32   (layer l's weight, streamed per step)
    b_ref  : [1, 1, F_PAD]     f32   (layer l's bias, streamed per step)
    o_ref  : [N_PAD, F_PAD]    f32   (written only at the last layer)
    h_ref  : VMEM scratch [N_PAD, F_PAD] f32 — activations carried across layers
    """
    l = pl.program_id(0)
    last = nlayers - 1

    @pl.when(l == 0)
    def _():
        h_ref[...] = x_ref[...]

    # support = h @ W_l        (f32 operands, f32 accumulation; N*F^2 term)
    support = jnp.dot(h_ref[...], w_ref[0],
                      preferred_element_type=jnp.float32)
    # out = adj @ support + b  (bf16 MXU operands, f32 accumulation; N^2*F term)
    out = jnp.dot(adj_ref[...], support.astype(jnp.bfloat16),
                  preferred_element_type=jnp.float32) + b_ref[0]

    @pl.when(l < last)
    def _():
        # ReLU; dropout is identity at inference.
        h_ref[...] = jnp.maximum(out, 0.0)

    @pl.when(l == last)
    def _():
        # Fused, numerically stable log_softmax over the first `nout`
        # (un-padded) feature columns; padded columns are masked out.
        col = lax.broadcasted_iota(jnp.int32, out.shape, 1)
        valid = col < nout
        m = jnp.max(jnp.where(valid, out, jnp.float32(-1e30)),
                    axis=1, keepdims=True)
        ex = jnp.where(valid, jnp.exp(out - m), 0.0)
        lse = jnp.log(jnp.sum(ex, axis=1, keepdims=True))
        o_ref[...] = (out - m - lse).astype(o_ref.dtype)


# ---------------------------------------------------------------------------
# Wrappers
# ---------------------------------------------------------------------------

def _round_up(v, m):
    return (v + m - 1) // m * m


def gcn_deep_forward(x, adj, params):
    """params: list of (w, b) tuples, length nlayers (>= 2)."""
    n, nfeat = x.shape
    nlayers = len(params)
    nout = params[-1][0].shape[1]

    # Lane-dense padded feature width shared by every layer; node dim padded
    # to a bf16-sublane-friendly multiple.
    f_pad = _round_up(max([nfeat] + [w.shape[1] for w, _ in params]), 128)
    n_pad = _round_up(n, 16)

    x_p = jnp.zeros((n_pad, f_pad), jnp.float32).at[:n, :nfeat].set(x)
    adj_p = (jnp.zeros((n_pad, n_pad), jnp.float32)
             .at[:n, :n].set(adj).astype(jnp.bfloat16))
    w_p = jnp.zeros((nlayers, f_pad, f_pad), jnp.float32)
    b_p = jnp.zeros((nlayers, 1, f_pad), jnp.float32)
    for i, (w, b) in enumerate(params):
        fi, fo = w.shape
        w_p = w_p.at[i, :fi, :fo].set(w)
        b_p = b_p.at[i, 0, :fo].set(b.reshape(-1))

    kernel = functools.partial(_gcn_fused_kernel, nlayers=nlayers, nout=nout)
    out_p = pl.pallas_call(
        kernel,
        out_shape=jax.ShapeDtypeStruct((n_pad, f_pad), jnp.float32),
        grid_spec=pltpu.PrefetchScalarGridSpec(
            num_scalar_prefetch=0,
            grid=(nlayers,),
            in_specs=[
                pl.BlockSpec((n_pad, f_pad), lambda l: (0, 0)),        # x (resident)
                pl.BlockSpec((n_pad, n_pad), lambda l: (0, 0)),        # adj (resident)
                pl.BlockSpec((1, f_pad, f_pad), lambda l: (l, 0, 0)),  # W_l (streamed)
                pl.BlockSpec((1, 1, f_pad), lambda l: (l, 0, 0)),      # b_l (streamed)
            ],
            out_specs=pl.BlockSpec((n_pad, f_pad), lambda l: (0, 0)),
            scratch_shapes=[pltpu.VMEM((n_pad, f_pad), jnp.float32)],
        ),
        compiler_params=pltpu.CompilerParams(
            # Layer axis carries the h scratch -> must run sequentially.
            dimension_semantics=("arbitrary",),
        ),
    )(x_p, adj_p, w_p, b_p)

    # Strip node / class padding.
    return out_p[:n, :nout]


def gcn_deep_reference(x, adj, params):
    """Pure-JAX f32 reference matching the PyTorch module (eval mode)."""
    h = x
    for i, (w, b) in enumerate(params):
        out = adj @ (h @ w) + b
        if i < len(params) - 1:
            h = jnp.maximum(out, 0.0)     # ReLU; dropout identity at inference
        else:
            h = jax.nn.log_softmax(out, axis=1)
    return h


def init_gcn_params(key, in_features, out_features):
    """Match GraphConvolution.reset_parameters: uniform(-stdv, stdv)."""
    stdv = 1.0 / math.sqrt(out_features)
    kw, kb = jax.random.split(key)
    w = jax.random.uniform(kw, (in_features, out_features),
                           minval=-stdv, maxval=stdv, dtype=jnp.float32)
    b = jax.random.uniform(kb, (1, out_features),
                           minval=-stdv, maxval=stdv, dtype=jnp.float32)
    return w, b


# ---------------------------------------------------------------------------
# Main
# ---------------------------------------------------------------------------

if __name__ == "__main__":
    # Small, GCN-consistent shapes.
    N = 16        # number of nodes
    NFEAT = 8     # input features
    NHID = 32     # hidden features
    NOUT = 4      # output classes
    NLAYERS = 4   # gcstart + 2 middle + gcend
    DROPOUT = 0.5  # unused at inference

    key = jax.random.PRNGKey(0)
    kx, kadj, kp = jax.random.split(key, 3)

    # Node feature matrix.
    x = jax.random.normal(kx, (N, NFEAT), dtype=jnp.float32)

    # Symmetric row-normalized adjacency with self-loops (dense).
    a = (jax.random.uniform(kadj, (N, N)) < 0.3).astype(jnp.float32)
    a = jnp.maximum(a, a.T) + jnp.eye(N, dtype=jnp.float32)
    deg = jnp.sum(a, axis=1, keepdims=True)
    adj = a / deg

    # Layer parameters: nfeat->nhid, (nlayers-2)x nhid->nhid, nhid->nout.
    dims = [NFEAT] + [NHID] * (NLAYERS - 1) + [NOUT]
    keys = jax.random.split(kp, NLAYERS)
    params = [init_gcn_params(keys[i], dims[i], dims[i + 1])
              for i in range(NLAYERS)]

    out = jax.jit(gcn_deep_forward)(x, adj, params)
    out = jax.block_until_ready(out)

    assert out.shape == (N, NOUT)
    # Rows of log_softmax should exp-sum to 1.
    assert bool(jnp.allclose(jnp.sum(jnp.exp(out), axis=1), 1.0, atol=1e-4))
    # Match the pure-f32 reference (generous tolerance: adj/support run on the
    # MXU in bf16 with f32 accumulation).
    ref = gcn_deep_reference(x, adj, params)
    assert bool(jnp.allclose(out, ref, atol=5e-2, rtol=5e-2))

    print("KERNEL_OK")
</pallas_src>

<mosaic_0001>
module attributes {stable_mosaic.version = 11 : i64} {
  func.func @_gcn_fused_kernel(%arg0: i32, %arg1: memref<16x128xf32, #tpu.memory_space<vmem>>, %arg2: memref<16x16xbf16, #tpu.memory_space<vmem>>, %arg3: memref<1x128x128xf32, #tpu.memory_space<vmem>>, %arg4: memref<1x1x128xf32, #tpu.memory_space<vmem>>, %arg5: memref<16x128xf32, #tpu.memory_space<vmem>>, %arg6: memref<16x128xf32, #tpu.memory_space<vmem>>) attributes {dimension_semantics = [#tpu.dimension_semantics<arbitrary>], iteration_bounds = array<i64: 4>, scalar_prefetch = 0 : i64, scratch_operands = 1 : i64, tpu.core_type = #tpu.core_type<tc>, window_params = [{pipeline_mode = #tpu.pipeline_mode<synchronous>, transform_indices = @transform_0, window_bounds = array<i64: 16, 128>}, {pipeline_mode = #tpu.pipeline_mode<synchronous>, transform_indices = @transform_1, window_bounds = array<i64: 16, 16>}, {transform_indices = @transform_2, window_bounds = array<i64: 1, 128, 128>}, {transform_indices = @transform_3, window_bounds = array<i64: 1, 1, 128>}, {pipeline_mode = #tpu.pipeline_mode<synchronous>, transform_indices = @transform_4, window_bounds = array<i64: 16, 128>}]} {
    %c0_i32 = arith.constant 0 : i32
    %0 = arith.cmpi eq, %arg0, %c0_i32 : i32
    %1 = arith.extui %0 : i1 to i32
    %c0_i32_0 = arith.constant 0 : i32
    %2 = arith.cmpi ne, %1, %c0_i32_0 : i32
    scf.if %2 {
      %c0_14 = arith.constant 0 : index
      %c0_15 = arith.constant 0 : index
      %20 = vector.load %arg1[%c0_14, %c0_15] : memref<16x128xf32, #tpu.memory_space<vmem>>, vector<16x128xf32>
      %c0_16 = arith.constant 0 : index
      %c0_17 = arith.constant 0 : index
      %21 = vector.load %arg6[%c0_16, %c0_17] : memref<16x128xf32, #tpu.memory_space<vmem>>, vector<16x128xf32>
      tpu.vector_store %arg6[%c0_16, %c0_17], %20 {strides = array<i32>} : memref<16x128xf32, #tpu.memory_space<vmem>>, vector<16x128xf32>,
    } else {
    }
    %c0 = arith.constant 0 : index
    %c0_1 = arith.constant 0 : index
    %3 = vector.load %arg6[%c0, %c0_1] : memref<16x128xf32, #tpu.memory_space<vmem>>, vector<16x128xf32>
    %c0_2 = arith.constant 0 : index
    %c0_3 = arith.constant 0 : index
    %c0_4 = arith.constant 0 : index
    %4 = vector.load %arg3[%c0_2, %c0_3, %c0_4] : memref<1x128x128xf32, #tpu.memory_space<vmem>>, vector<1x128x128xf32>
    %5 = vector.shape_cast %4 : vector<1x128x128xf32> to vector<128x128xf32>
    %cst = arith.constant dense<0.000000e+00> : vector<16x128xf32>
    %6 = tpu.matmul %3, %5, %cst {dimension_numbers = #tpu.dot_dimension_numbers<[1], [0], [0], [1], [0, 0, 1, 1], [], []>} : vector<16x128xf32>, vector<128x128xf32>, vector<16x128xf32> -> vector<16x128xf32>
    %c0_5 = arith.constant 0 : index
    %c0_6 = arith.constant 0 : index
    %7 = vector.load %arg2[%c0_5, %c0_6] : memref<16x16xbf16, #tpu.memory_space<vmem>>, vector<16x16xbf16>
    %8 = arith.truncf %6 : vector<16x128xf32> to vector<16x128xbf16>
    %cst_7 = arith.constant dense<0.000000e+00> : vector<16x128xf32>
    %9 = tpu.matmul %7, %8, %cst_7 {dimension_numbers = #tpu.dot_dimension_numbers<[1], [0], [0], [1], [0, 0, 1, 1], [], []>} : vector<16x16xbf16>, vector<16x128xbf16>, vector<16x128xf32> -> vector<16x128xf32>
    %c0_8 = arith.constant 0 : index
    %c0_9 = arith.constant 0 : index
    %c0_10 = arith.constant 0 : index
    %10 = vector.load %arg4[%c0_8, %c0_9, %c0_10] : memref<1x1x128xf32, #tpu.memory_space<vmem>>, vector<1x1x128xf32>
    %11 = vector.shape_cast %10 : vector<1x1x128xf32> to vector<1x128xf32>
    %12 = vector.broadcast %11 : vector<1x128xf32> to vector<16x128xf32>
    %13 = arith.addf %9, %12 : vector<16x128xf32>
    %c3_i32 = arith.constant 3 : i32
    %14 = arith.cmpi slt, %arg0, %c3_i32 : i32
    %15 = arith.extui %14 : i1 to i32
    %c0_i32_11 = arith.constant 0 : i32
    %16 = arith.cmpi ne, %15, %c0_i32_11 : i32
    scf.if %16 {
      %cst_14 = arith.constant 0.000000e+00 : f32
      %20 = vector.broadcast %cst_14 : f32 to vector<16x128xf32>
      %21 = arith.maximumf %13, %20 : vector<16x128xf32>
      %c0_15 = arith.constant 0 : index
      %c0_16 = arith.constant 0 : index
      %22 = vector.load %arg6[%c0_15, %c0_16] : memref<16x128xf32, #tpu.memory_space<vmem>>, vector<16x128xf32>
      tpu.vector_store %arg6[%c0_15, %c0_16], %21 {strides = array<i32>} : memref<16x128xf32, #tpu.memory_space<vmem>>, vector<16x128xf32>,
    } else {
    }
    %c3_i32_12 = arith.constant 3 : i32
    %17 = arith.cmpi eq, %arg0, %c3_i32_12 : i32
    %18 = arith.extui %17 : i1 to i32
    %c0_i32_13 = arith.constant 0 : i32
    %19 = arith.cmpi ne, %18, %c0_i32_13 : i32
    scf.if %19 {
      %20 = tpu.iota {dimensions = array<i32: 1>} : vector<16x128xi32>
      %c4_i32 = arith.constant 4 : i32
      %21 = vector.broadcast %c4_i32 : i32 to vector<16x128xi32>
      %22 = arith.cmpi slt, %20, %21 : vector<16x128xi32>
      %cst_14 = arith.constant -1.000000e+30 : f32
      %23 = vector.broadcast %cst_14 : f32 to vector<16x128xf32>
      %24 = arith.select %22, %13, %23 : vector<16x128xi1>, vector<16x128xf32>
      %cst_15 = arith.constant dense<0xFF800000> : vector<16xf32>
      %25 = vector.multi_reduction <maximumf>, %24, %cst_15 [1] : vector<16x128xf32> to vector<16xf32>
      %26 = vector.shape_cast %25 : vector<16xf32> to vector<16x1xf32>
      %27 = vector.broadcast %26 : vector<16x1xf32> to vector<16x128xf32>
      %28 = arith.subf %13, %27 : vector<16x128xf32>
      %29 = math.exp %28 : vector<16x128xf32>
      %cst_16 = arith.constant 0.000000e+00 : f32
      %30 = vector.broadcast %cst_16 : f32 to vector<16x128xf32>
      %31 = arith.select %22, %29, %30 : vector<16x128xi1>, vector<16x128xf32>
      %cst_17 = arith.constant dense<0.000000e+00> : vector<16xf32>
      %32 = vector.multi_reduction <add>, %31, %cst_17 [1] : vector<16x128xf32> to vector<16xf32>
      %33 = vector.shape_cast %32 : vector<16xf32> to vector<16x1xf32>
      %34 = math.log %33 : vector<16x1xf32>
      %35 = vector.broadcast %26 : vector<16x1xf32> to vector<16x128xf32>
      %36 = arith.subf %13, %35 : vector<16x128xf32>
      %37 = vector.broadcast %34 : vector<16x1xf32> to vector<16x128xf32>
      %38 = arith.subf %36, %37 : vector<16x128xf32>
      %c0_18 = arith.constant 0 : index
      %c0_19 = arith.constant 0 : index
      %39 = vector.load %arg5[%c0_18, %c0_19] : memref<16x128xf32, #tpu.memory_space<vmem>>, vector<16x128xf32>
      tpu.vector_store %arg5[%c0_18, %c0_19], %38 {strides = array<i32>} : memref<16x128xf32, #tpu.memory_space<vmem>>, vector<16x128xf32>,
    } else {
    }
    return
  }
  func.func @transform_0(%arg0: i32) -> (i32, i32) {
    %c0_i32 = arith.constant 0 : i32
    %c0_i32_0 = arith.constant 0 : i32
    %c0_i32_1 = arith.constant 0 : i32
    return %c0_i32, %c0_i32_0 : i32, i32
  }
  func.func @transform_1(%arg0: i32) -> (i32, i32) {
    %c0_i32 = arith.constant 0 : i32
    %c0_i32_0 = arith.constant 0 : i32
    %c0_i32_1 = arith.constant 0 : i32
    return %c0_i32, %c0_i32_0 : i32, i32
  }
  func.func @transform_2(%arg0: i32) -> (i32, i32, i32) {
    %c0_i32 = arith.constant 0 : i32
    %c0_i32_0 = arith.constant 0 : i32
    %c0_i32_1 = arith.constant 0 : i32
    return %arg0, %c0_i32, %c0_i32_0 : i32, i32, i32
  }
  func.func @transform_3(%arg0: i32) -> (i32, i32, i32) {
    %c0_i32 = arith.constant 0 : i32
    %c0_i32_0 = arith.constant 0 : i32
    %c0_i32_1 = arith.constant 0 : i32
    return %arg0, %c0_i32, %c0_i32_0 : i32, i32, i32
  }
  func.func @transform_4(%arg0: i32) -> (i32, i32) {
    %c0_i32 = arith.constant 0 : i32
    %c0_i32_0 = arith.constant 0 : i32
    %c0_i32_1 = arith.constant 0 : i32
    return %c0_i32, %c0_i32_0 : i32, i32
  }
}

</mosaic_0001>

<llo_original>
// kernel: gcn_deep_forward.1
$region0: #{gcn_deep_forward.1}
  #allocation0 [shape = 'u32[]', space=smem, size = 0x4, offset = 0x4, fixed_abs, tag = 'smem constant byte address 0x4 - core index']
  #allocation1 [shape = 'u32[144,128]{1,0:T(1,128)}', space=vmem, size = 0x12000, scoped, tag = 'internal scratch']
  #allocation2 [shape = 'f32[16,128]{1,0:T(8,128)}', space=vmem, size = 0x2000, scoped, tag = 'scratch operand']
  %s0 = inlined_call_operand.vmem [shape: f32[16,128], index: 0, kind: input, shape index: {}]
  %s1 = inlined_call_operand.vmem [shape: bf16[16,16], index: 1, kind: input, shape index: {}]
  %s2 = inlined_call_operand.vmem [shape: f32[4,128,128], index: 2, kind: input, shape index: {}]
  %s3 = inlined_call_operand.vmem [shape: f32[4,1,128], index: 3, kind: input, shape index: {}]
  %s4 = inlined_call_operand.vmem [shape: f32[16,128], index: 4, kind: output, shape index: {}]
  %s5 = sld [smem:[#allocation0]]
  $region61: #{gcn_deep_forward.1} parent=0
    _
  %s7 = ssub.s32 1, %s5
  %s8 = scalar_select 0, %s7, %s5
  loop: start=0, step=1, limit=6
  $region2: #{gcn_deep_forward.1} parent=0 // loop_pre_header
    _
  $region3: #{gcn_deep_forward.1} parent=0 // loop_header
    %s10 = sphi 0, %s14
    %p11 = scmp.ge.s32.totalorder %s10, 6
    %s18 = sphi 0, %s18
    %s20 = sphi 0, %s18
    %s21 = sphi 0, %s20
    %s35 = sphi 0, %s21
    %s39 = sphi 0, %s39
    %s41 = sphi 0, %s39
    %s42 = sphi 0, %s41
    %s56 = sphi 0, %s42
    %s62 = sphi 0, %s64
    %s65 = sphi 0, %s62
    %s66 = sphi 0, %s65
    %s82 = sphi 0, %s66
    %s88 = sphi 0, %s90
    %s91 = sphi 0, %s88
    %s92 = sphi 0, %s91
    %s108 = sphi 0, %s92
    %s112 = sphi 0, %s112
    %s114 = sphi 0, %s112
    %s115 = sphi 0, %s114
    %s129 = sphi 0, %s115
  $region4: #{gcn_deep_forward.1} parent=0 // loop_header_branch
    %13 = sbr.rel (%p11) target = $region8
  $region5: #{gcn_deep_forward.1} parent=0 // loop_body
    %s15 = ssub.s32 %s10, 1
    %s16 = ssub.s32 %s10, 2
    %s17 = sadd.s32 %s10, 1
    %s19 = sadd.s32 %s18, 1
    %p22 = scmp.eq.s32.totalorder %s10, 3
    %p23 = scmp.ne.s32.totalorder %s18, %s20
    %p24 = scmp.eq.s32.totalorder %s10, 0
    %p25 = por %p23, %p24
    %p26 = scmp.ne.s32.totalorder %s18, %s20
    %p27 = scmp.eq.s32.totalorder %s15, 3
    %p28 = por %p26, %p27
    %p29 = scmp.ne.s32.totalorder %s20, %s21
    %p30 = scmp.eq.s32.totalorder %s15, 0
    %p31 = por %p29, %p30
    %p32 = scmp.ne.s32.totalorder %s20, %s21
    %p33 = scmp.eq.s32.totalorder %s16, 3
    %p34 = por %p32, %p33
    %p36 = scmp.ne.s32.totalorder %s21, %s35
    %p37 = scmp.eq.s32.totalorder %s16, 0
    %p38 = por %p36, %p37
    %s40 = sadd.s32 %s39, 1
    %p43 = scmp.eq.s32.totalorder %s10, 3
    %p44 = scmp.ne.s32.totalorder %s39, %s41
    %p45 = scmp.eq.s32.totalorder %s10, 0
    %p46 = por %p44, %p45
    %p47 = scmp.ne.s32.totalorder %s39, %s41
    %p48 = scmp.eq.s32.totalorder %s15, 3
    %p49 = por %p47, %p48
    %p50 = scmp.ne.s32.totalorder %s41, %s42
    %p51 = scmp.eq.s32.totalorder %s15, 0
    %p52 = por %p50, %p51
    %p53 = scmp.ne.s32.totalorder %s41, %s42
    %p54 = scmp.eq.s32.totalorder %s16, 3
    %p55 = por %p53, %p54
    %p57 = scmp.ne.s32.totalorder %s42, %s56
    %p58 = scmp.eq.s32.totalorder %s16, 0
    %p59 = por %p57, %p58
    %s60 = ssub.s32 %s10, %s17
    %p61 = scmp.eq.s32.totalorder %s60, 0
    %s63 = sadd.s32 %s62, 1
    %s64 = scalar_select %p61, %s62, %s63
    %p67 = pneg %p61
    %p68 = scmp.eq.s32.totalorder %s10, 3
    %p69 = por %p67, %p68
    %p70 = scmp.ne.s32.totalorder %s62, %s65
    %p71 = scmp.eq.s32.totalorder %s10, 0
    %p72 = por %p70, %p71
    %p73 = scmp.ne.s32.totalorder %s62, %s65
    %p74 = scmp.eq.s32.totalorder %s15, 3
    %p75 = por %p73, %p74
    %p76 = scmp.ne.s32.totalorder %s65, %s66
    %p77 = scmp.eq.s32.totalorder %s15, 0
    %p78 = por %p76, %p77
    %p79 = scmp.ne.s32.totalorder %s65, %s66
    %p80 = scmp.eq.s32.totalorder %s16, 3
    %p81 = por %p79, %p80
    %p83 = scmp.ne.s32.totalorder %s66, %s82
    %p84 = scmp.eq.s32.totalorder %s16, 0
    %p85 = por %p83, %p84
    %s86 = ssub.s32 %s10, %s17
    %p87 = scmp.eq.s32.totalorder %s86, 0
    %s89 = sadd.s32 %s88, 1
    %s90 = scalar_select %p87, %s88, %s89
    %p93 = pneg %p87
    %p94 = scmp.eq.s32.totalorder %s10, 3
    %p95 = por %p93, %p94
    %p96 = scmp.ne.s32.totalorder %s88, %s91
    %p97 = scmp.eq.s32.totalorder %s10, 0
    %p98 = por %p96, %p97
    %p99 = scmp.ne.s32.totalorder %s88, %s91
    %p100 = scmp.eq.s32.totalorder %s15, 3
    %p101 = por %p99, %p100
    %p102 = scmp.ne.s32.totalorder %s91, %s92
    %p103 = scmp.eq.s32.totalorder %s15, 0
    %p104 = por %p102, %p103
    %p105 = scmp.ne.s32.totalorder %s91, %s92
    %p106 = scmp.eq.s32.totalorder %s16, 3
    %p107 = por %p105, %p106
    %p109 = scmp.ne.s32.totalorder %s92, %s108
    %p110 = scmp.eq.s32.totalorder %s16, 0
    %p111 = por %p109, %p110
    %s113 = sadd.s32 %s112, 1
    %p116 = scmp.eq.s32.totalorder %s10, 3
    %p117 = scmp.ne.s32.totalorder %s112, %s114
    %p118 = scmp.eq.s32.totalorder %s10, 0
    %p119 = por %p117, %p118
    %p120 = scmp.ne.s32.totalorder %s112, %s114
    %p121 = scmp.eq.s32.totalorder %s15, 3
    %p122 = por %p120, %p121
    %p123 = scmp.ne.s32.totalorder %s114, %s115
    %p124 = scmp.eq.s32.totalorder %s15, 0
    %p125 = por %p123, %p124
    %p126 = scmp.ne.s32.totalorder %s114, %s115
    %p127 = scmp.eq.s32.totalorder %s16, 3
    %p128 = por %p126, %p127
    %p130 = scmp.ne.s32.totalorder %s115, %s129
    %p131 = scmp.eq.s32.totalorder %s16, 0
    %p132 = por %p130, %p131
    %p133 = scmp.le.s32.totalorder 1, %s10
    %p134 = scmp.lt.s32.totalorder %s10, 5
    %p135 = pnand %p133, %p134
    %p136 = pneg %p135
    // Predicated region
    $region9: #{gcn_deep_forward.1} parent=5 // pred_check
      _
    $region10: #{gcn_deep_forward.1} parent=5 // pred_check_branch
      %138 = sbr.rel (%p135) target = $region12
    $region11: #{gcn_deep_forward.1} parent=5 // pred_region
      %s139 = ssub.s32 %s10, 1
      // Predicated region
      $region13: #{gcn_deep_forward.1} parent=11 // pred_check
        %p140 = pneg %p31
      $region14: #{gcn_deep_forward.1} parent=11 // pred_check_branch
        %142 = sbr.rel (%p140) target = $region16
      $region15: #{gcn_deep_forward.1} parent=11 // pred_region
        _
      $region16: #{gcn_deep_forward.1} parent=11 // pred_fallthru
        _
      // Predicated region
      $region17: #{gcn_deep_forward.1} parent=11 // pred_check
        %p143 = pneg %p52
      $region18: #{gcn_deep_forward.1} parent=11 // pred_check_branch
        %145 = sbr.rel (%p143) target = $region20
      $region19: #{gcn_deep_forward.1} parent=11 // pred_region
        _
      $region20: #{gcn_deep_forward.1} parent=11 // pred_fallthru
        _
    $region12: #{gcn_deep_forward.1} parent=5 // pred_fallthru
      _
    %p146 = scmp.lt.s32.totalorder %s10, 4
    // Predicated region
    $region21: #{gcn_deep_forward.1} parent=5 // pred_check
      %p147 = pneg %p146
    $region22: #{gcn_deep_forward.1} parent=5 // pred_check_branch
      %149 = sbr.rel (%p147) target = $region24
    $region23: #{gcn_deep_forward.1} parent=5 // pred_region
      // Predicated region
      $region25: #{gcn_deep_forward.1} parent=23 // pred_check
        %p150 = pneg %p72
      $region26: #{gcn_deep_forward.1} parent=23 // pred_check_branch
        %152 = sbr.rel (%p150) target = $region28
      $region27: #{gcn_deep_forward.1} parent=23 // pred_region
        %p153 = scmp.lt.s32.totalorder %s10, 3
        %s154 = scalar_select %p153, %s10, 3
        %s155 = smul.addr %s154, 16
        %s156 = smul.addr %s155, 8
        %s157 = scalar_lea.vmem %s2, %s156
      $region28: #{gcn_deep_forward.1} parent=23 // pred_fallthru
        _
      // Predicated region
      $region29: #{gcn_deep_forward.1} parent=23 // pred_check
        %p158 = pneg %p98
      $region30: #{gcn_deep_forward.1} parent=23 // pred_check_branch
        %160 = sbr.rel (%p158) target = $region32
      $region31: #{gcn_deep_forward.1} parent=23 // pred_region
        %p161 = scmp.lt.s32.totalorder %s10, 3
        %s162 = scalar_select %p161, %s10, 3
        %s163 = scalar_lea.vmem %s3, %s162
      $region32: #{gcn_deep_forward.1} parent=23 // pred_fallthru
        _
    $region24: #{gcn_deep_forward.1} parent=5 // pred_fallthru
      _
    %p164 = scmp.le.s32.totalorder 1, %s10
    %p165 = scmp.lt.s32.totalorder %s10, 5
    %p166 = pnand %p164, %p165
    %p167 = pneg %p166
    // Predicated region
    $region33: #{gcn_deep_forward.1} parent=5 // pred_check
      _
    $region34: #{gcn_deep_forward.1} parent=5 // pred_check_branch
      %169 = sbr.rel (%p166) target = $region36
    $region35: #{gcn_deep_forward.1} parent=5 // pred_region
      %s170 = ssub.s32 %s10, 1
      %p171 = pneg %p31
      %p172 = pneg %p28
      %p173 = pneg %p52
      %p174 = pneg %p49
      %p175 = scmp.lt.s32.totalorder %s15, 3
      %s176 = scalar_select %p175, %s15, 3
      %s177 = smul.addr %s176, 16
      %s178 = smul.addr %s177, 8
      %s179 = scalar_lea.vmem %s2, %s178
      %p180 = pneg %p78
      %p181 = pneg %p75
      %p182 = scmp.lt.s32.totalorder %s15, 3
      %s183 = scalar_select %p182, %s15, 3
      %s184 = scalar_lea.vmem %s3, %s183
      %p185 = pneg %p104
      %p186 = pneg %p101
      %p187 = pneg %p125
      %p188 = pneg %p122
      %p189 = scmp.lt.s32.totalorder %s15, 3
      %s190 = scalar_select %p189, %s15, 3
      %s191 = smul.addr %s190, 16
      %s192 = smul.addr %s191, 8
      %s193 = scalar_lea.vmem %s2, %s192
      %p194 = scmp.lt.s32.totalorder %s15, 3
      %s195 = scalar_select %p194, %s15, 3
      %s196 = scalar_lea.vmem %s3, %s195
      %p198 = scmp.eq.s32.totalorder %s15, 0
      // Predicated region
      $region37: #{gcn_deep_forward.1} parent=35 // pred_check
        %p199 = pneg %p198
      $region38: #{gcn_deep_forward.1} parent=35 // pred_check_branch
        %201 = sbr.rel (%p199) target = $region40
      $region39: #{gcn_deep_forward.1} parent=35 // pred_region
        %v202 = vld [vmem:[%s0] sm:$0xff]
        %v203 = vld [vmem:[%s0 + $0x8] sm:$0xff]
        %204 = vst [vmem:[#allocation2] sm:$0xff] %v202
        %205 = vst [vmem:[#allocation2 + $0x8] sm:$0xff] %v203
      $region40: #{gcn_deep_forward.1} parent=35 // pred_fallthru
        _
      %v206 = vld [vmem:[#allocation2] sm:$0xff]
      %v207 = vld [vmem:[#allocation2 + $0x8] sm:$0xff]
      %v208 = vld [vmem:[%s193] sm:$0xff]
      %v209 = vld [vmem:[%s193 + $0x8] sm:$0xff]
      %v210 = vld [vmem:[%s193 + $0x10] sm:$0xff]
      %v211 = vld [vmem:[%s193 + $0x18] sm:$0xff]
      %v212 = vld [vmem:[%s193 + $0x20] sm:$0xff]
      %v213 = vld [vmem:[%s193 + $0x28] sm:$0xff]
      %v214 = vld [vmem:[%s193 + $0x30] sm:$0xff]
      %v215 = vld [vmem:[%s193 + $0x38] sm:$0xff]
      %v216 = vld [vmem:[%s193 + $0x40] sm:$0xff]
      %v217 = vld [vmem:[%s193 + $0x48] sm:$0xff]
      %v218 = vld [vmem:[%s193 + $0x50] sm:$0xff]
      %v219 = vld [vmem:[%s193 + $0x58] sm:$0xff]
      %v220 = vld [vmem:[%s193 + $0x60] sm:$0xff]
      %v221 = vld [vmem:[%s193 + $0x68] sm:$0xff]
      %v222 = vld [vmem:[%s193 + $0x70] sm:$0xff]
      %v223 = vld [vmem:[%s193 + $0x78] sm:$0xff]
      %224 = vmatprep.subr.mxu0 0.0
      %225 = vmatpush1.msra.mxu0 %v223
      %226 = vmatprep.subr.mxu0 0.0
      %227 = vmatpush1.msra.mxu0 %v222
      %228 = vmatprep.subr.mxu0 0.0
      %229 = vmatpush1.msra.mxu0 %v221
      %230 = vmatprep.subr.mxu0 0.0
      %231 = vmatpush1.msra.mxu0 %v220
      %232 = vmatprep.subr.mxu0 0.0
      %233 = vmatpush1.msra.mxu0 %v219
      %234 = vmatprep.subr.mxu0 0.0
      %235 = vmatpush1.msra.mxu0 %v218
      %236 = vmatprep.subr.mxu0 0.0
      %237 = vmatpush1.msra.mxu0 %v217
      %238 = vmatprep.subr.mxu0 0.0
      %239 = vmatpush1.msra.mxu0 %v216
      %240 = vmatprep.subr.mxu0 0.0
      %241 = vmatpush1.msra.mxu0 %v215
      %242 = vmatprep.subr.mxu0 0.0
      %243 = vmatpush1.msra.mxu0 %v214
      %244 = vmatprep.subr.mxu0 0.0
      %245 = vmatpush1.msra.mxu0 %v213
      %246 = vmatprep.subr.mxu0 0.0
      %247 = vmatpush1.msra.mxu0 %v212
      %248 = vmatprep.subr.mxu0 0.0
      %249 = vmatpush1.msra.mxu0 %v211
      %250 = vmatprep.subr.mxu0 0.0
      %251 = vmatpush1.msra.mxu0 %v210
      %252 = vmatprep.subr.mxu0 0.0
      %253 = vmatpush1.msra.mxu0 %v209
      %254 = vmatprep.subr.mxu0 0.0
      %255 = vmatpush1.msra.mxu0 %v208
      %256 = vmatprep.subr.mxu0 0.0
      %257 = vmatpush2.msra.mxu0 0.0
      %258 = vmatprep.subr.mxu0 0.0
      %259 = vmatpush2.msra.mxu0 0.0
      %260 = vmatprep.subr.mxu0 0.0
      %261 = vmatpush2.msra.mxu0 0.0
      %262 = vmatprep.subr.mxu0 0.0
      %263 = vmatpush2.msra.mxu0 0.0
      %264 = vmatprep.subr.mxu0 0.0
      %265 = vmatpush2.msra.mxu0 0.0
      %266 = vmatprep.subr.mxu0 0.0
      %267 = vmatpush2.msra.mxu0 0.0
      %268 = vmatprep.subr.mxu0 0.0
      %269 = vmatpush2.msra.mxu0 0.0
      %270 = vmatprep.subr.mxu0 0.0
      %271 = vmatpush2.msra.mxu0 0.0
      %272 = vmatprep.subr.mxu0 0.0
      %273 = vmatpush2.msra.mxu0 0.0
      %274 = vmatprep.subr.mxu0 0.0
      %275 = vmatpush2.msra.mxu0 0.0
      %276 = vmatprep.subr.mxu0 0.0
      %277 = vmatpush2.msra.mxu0 0.0
      %278 = vmatprep.subr.mxu0 0.0
      %279 = vmatpush2.msra.mxu0 0.0
      %280 = vmatprep.subr.mxu0 0.0
      %281 = vmatpush2.msra.mxu0 0.0
      %282 = vmatprep.subr.mxu0 0.0
      %283 = vmatpush2.msra.mxu0 0.0
      %284 = vmatprep.subr.mxu0 0.0
      %285 = vmatpush2.msra.mxu0 0.0
      %286 = vmatprep.subr.mxu0 0.0
      %287 = vmatpush2.msra.mxu0 0.0
      %288 = vmatprep.mubr.f32.mxu0 0.0
      %289 = vmatmul.mubr.f32.gmra.mxu0 %v206
      %v290 = vpop.f32.mrf.mxu0
      %v291 = vadd.f32 0.0, %v290
      %v292 = vpop.f32.mrf.mxu0
      %293 = vmatprep.mubr.f32.mxu0 0.0
      %294 = vmatmul.mubr.f32.gmra.mxu0 %v207
      %v295 = vpop.f32.mrf.mxu0
      %v296 = vadd.f32 0.0, %v295
      %v297 = vpop.f32.mrf.mxu0
      %298 = vdwg.mxu0
      %v299 = vld [vmem:[%s1] sm:$0xf]
      %v300 = vld [vmem:[%s1 + $0x4] sm:$0xf]
      %v301 = vpack.c.bf16 %v296, %v291
      %v302 = vld [vmem:[%s196] sm:$0x1]
      %v304 = vlaneseq
      %v305 = vshrl.u32 %v304, 7
      %v306 = vsub.s32 0, %v305
      %v307 = vrot.slane %v302, %v306
      %v311 = vunpack.c.l.b16 %v299
      %v312 = vunpack.c.l.b16 %v300
      %v313 = vpack.c.b16 %v312, %v311
      %vm314 = vcmask 130048
      %v316 = vsel %vm314, %v313, 0
      %318 = vmatprep.subr.bf16.mxu0 0
      %319 = vmatpush1.bf16.msra.mxu0 0
      %320 = vmatprep.subr.bf16.mxu0 0
      %321 = vmatpush1.bf16.msra.mxu0 0
      %322 = vmatprep.subr.bf16.mxu0 0
      %323 = vmatpush1.bf16.msra.mxu0 0
      %324 = vmatprep.subr.bf16.mxu0 0
      %325 = vmatpush1.bf16.msra.mxu0 0
      %326 = vmatprep.subr.bf16.mxu0 0
      %327 = vmatpush1.bf16.msra.mxu0 0
      %328 = vmatprep.subr.bf16.mxu0 0
      %329 = vmatpush1.bf16.msra.mxu0 0
      %330 = vmatprep.subr.bf16.mxu0 0
      %331 = vmatpush1.bf16.msra.mxu0 0
      %332 = vmatprep.subr.bf16.mxu0 0
      %333 = vmatpush1.bf16.msra.mxu0 %v301
      %334 = vmatprep.subr.bf16.mxu0 0
      %335 = vmatpush2.bf16.msra.mxu0 0
      %336 = vmatprep.subr.bf16.mxu0 0
      %337 = vmatpush2.bf16.msra.mxu0 0
      %338 = vmatprep.subr.bf16.mxu0 0
      %339 = vmatpush2.bf16.msra.mxu0 0
      %340 = vmatprep.subr.bf16.mxu0 0
      %341 = vmatpush2.bf16.msra.mxu0 0
      %342 = vmatprep.subr.bf16.mxu0 0
      %343 = vmatpush2.bf16.msra.mxu0 0
      %344 = vmatprep.subr.bf16.mxu0 0
      %345 = vmatpush2.bf16.msra.mxu0 0
      %346 = vmatprep.subr.bf16.mxu0 0
      %347 = vmatpush2.bf16.msra.mxu0 0
      %348 = vmatprep.subr.bf16.mxu0 0
      %349 = vmatpush2.bf16.msra.mxu0 0
      %350 = vmatprep.mubr.bf16.mxu0 0
      %351 = vmatmul.mubr.bf16.gmra.mxu0 %v316
      %v352 = vpop.f32.mrf.mxu0
      %v353 = vadd.f32 %v307, %v352
      %v354 = vpop.f32.mrf.mxu0
      %v355 = vpop.f32.mrf.mxu0
      %v356 = vadd.f32 %v307, %v355
      %v357 = vpop.f32.mrf.mxu0
      %358 = vdwg.mxu0
      %p359 = scmp.lt.s32.totalorder %s15, 3
      // Predicated region
      $region41: #{gcn_deep_forward.1} parent=35 // pred_check
        %p360 = pneg %p359
      $region42: #{gcn_deep_forward.1} parent=35 // pred_check_branch
        %362 = sbr.rel (%p360) target = $region44
      $region43: #{gcn_deep_forward.1} parent=35 // pred_region
        %v363 = vmax.f32 %v353, 0.0
        %v364 = vmax.f32 %v356, 0.0
        %365 = vst [vmem:[#allocation2] sm:$0xff] %v363
        %366 = vst [vmem:[#allocation2 + $0x8] sm:$0xff] %v364
      $region44: #{gcn_deep_forward.1} parent=35 // pred_fallthru
        _
      %p367 = scmp.eq.s32.totalorder %s15, 3
      // Predicated region
      $region45: #{gcn_deep_forward.1} parent=35 // pred_check
        %p368 = pneg %p367
      $region46: #{gcn_deep_forward.1} parent=35 // pred_check_branch
        %370 = sbr.rel (%p368) target = $region48
      $region47: #{gcn_deep_forward.1} parent=35 // pred_region
        %v371 = vlaneseq
        %v372 = vand.u32 %v371, 127
        %vm373 = vcmp.lt.s32.totalorder %v372, 4
        %v374 = vsel %vm373, %v353, -1e+30
        %v375 = vsel %vm373, %v356, -1e+30
        %376 = vmax.xlane.f32.xlu0 %v374
        %v377 = vpop.xlane.xlu0 %376
        %378 = vmax.xlane.f32.xlu0 %v375
        %v379 = vpop.xlane.xlu0 %378
        %v380 = vsub.f32 %v353, %v377
        %v381 = vsub.f32 %v356, %v379
        %v382 = vmul.f32 %v380, 1.442695
        %v383 = vpow.pop %v382
        %v384 = vmul.f32 %v381, 1.442695
        %v385 = vpow.pop %v384
        %v386 = vsel %vm373, %v383, 0.0
        %v387 = vsel %vm373, %v385, 0.0
        %388 = vadd.xlane.f32.xlu0 %v386
        %v389 = vpop.xlane.xlu0 %388
        %390 = vadd.xlane.f32.xlu0 %v387
        %v391 = vpop.xlane.xlu0 %390
        %v392 = vlog2.pop %v389
        %v393 = vmul.f32 %v392, 0.6931472
        %v394 = vlog2.pop %v391
        %v395 = vmul.f32 %v394, 0.6931472
        %v396 = vsub.f32 %v380, %v393
        %v397 = vsub.f32 %v381, %v395
        %398 = vst [vmem:[%s4] sm:$0xff] %v396
        %399 = vst [vmem:[%s4 + $0x8] sm:$0xff] %v397
      $region48: #{gcn_deep_forward.1} parent=35 // pred_fallthru
        _
      // Predicated region
      $region49: #{gcn_deep_forward.1} parent=35 // pred_check
        %p400 = pneg %p122
      $region50: #{gcn_deep_forward.1} parent=35 // pred_check_branch
        %402 = sbr.rel (%p400) target = $region52
      $region51: #{gcn_deep_forward.1} parent=35 // pred_region
        _
      $region52: #{gcn_deep_forward.1} parent=35 // pred_fallthru
        _
      // Predicated region
      $region53: #{gcn_deep_forward.1} parent=35 // pred_check
        %p403 = pneg %p122
      $region54: #{gcn_deep_forward.1} parent=35 // pred_check_branch
        %405 = sbr.rel (%p403) target = $region56
      $region55: #{gcn_deep_forward.1} parent=35 // pred_region
        _
      $region56: #{gcn_deep_forward.1} parent=35 // pred_fallthru
        _
    $region36: #{gcn_deep_forward.1} parent=5 // pred_fallthru
      _
    %p406 = scmp.le.s32.totalorder 2, %s10
    // Predicated region
    $region57: #{gcn_deep_forward.1} parent=5 // pred_check
      %p407 = pneg %p406
    $region58: #{gcn_deep_forward.1} parent=5 // pred_check_branch
      %409 = sbr.rel (%p407) target = $region60
    $region59: #{gcn_deep_forward.1} parent=5 // pred_region
      %s410 = ssub.s32 %s10, 2
    $region60: #{gcn_deep_forward.1} parent=5 // pred_fallthru
      _
  $region6: #{gcn_deep_forward.1} parent=0 // loop_footer
    %s14 = sadd.s32 1, %s10
  $region7: #{gcn_deep_forward.1} parent=0 // loop_footer_branch
    %9 = sbr.rel target = $region3
  $region8: #{gcn_deep_forward.1} parent=0 // loop_exit
    _

</llo_original>
